<compile_context>
chip_gen: v6e
topology: v6e:2x2x1
jax: 0.10.0
libtpu: 0.0.40
codegen_flags: <defaults>
</compile_context>

<pallas_src>
import jax
import jax.numpy as jnp
from jax.experimental import pallas as pl
from jax.experimental.pallas import tpu as pltpu

_SUBLANES = 8
_LANES = 128
_ROWS_BLK = 512  # (512, 128) f32 block = 256 KiB; in+out double-buffered ~ 1 MiB


def _affine_kernel(w_ref, b_ref, x_ref, o_ref):
    # w_ref/b_ref: (1, 1) float32 scalars in SMEM. x_ref/o_ref: (rows, 128) VMEM.
    w = w_ref[0, 0]
    b = b_ref[0, 0]
    y = x_ref[...].astype(jnp.float32) * w + b  # pure VPU multiply-add
    o_ref[...] = y.astype(o_ref.dtype)


@jax.jit
def linear_forward(x, weight, bias):
    """nn.Linear(1, 1) forward: x (N, 1), weight (1, 1), bias (1,) -> (N, 1)."""
    n, in_f = x.shape
    out_f = weight.shape[0]
    assert in_f == 1 and out_f == 1, "kernel specialized for nn.Linear(1, 1)"
    # TODO(synk): for in/out_features > 1 switch to an MXU matmul kernel with a
    # pre-transposed weight, f32 VMEM accumulator (pl.when init/finalize), K as
    # the last "arbitrary" grid axis, and 256-multiple tiles on v6e/v7x
    # (128-multiples on v5e).

    dtype = x.dtype

    # Scalars forced to float32 in SMEM; the broadcast result is cast back to
    # the slab dtype inside the kernel.
    w_smem = weight.astype(jnp.float32).reshape(1, 1)
    b_smem = bias.astype(jnp.float32).reshape(1, 1)

    # NOTE: at N~100 a plain fused `x * w + b` inside this jit would match the
    # custom call; the Pallas kernel is kept as the requested implementation
    # and scales via the tiled branch below.
    x_flat = x.reshape(-1)

    if pl.cdiv(n, _LANES) <= _ROWS_BLK:
        # Small-N path: single grid point, whole lane-dense slab as one block.
        tile = _SUBLANES * _LANES
        padded = pl.cdiv(n, tile) * tile
        rows = padded // _LANES
        x_slab = jnp.pad(x_flat, (0, padded - n)).reshape(rows, _LANES)
        y_slab = pl.pallas_call(
            _affine_kernel,
            out_shape=jax.ShapeDtypeStruct((rows, _LANES), dtype),
            in_specs=[
                pl.BlockSpec(memory_space=pltpu.MemorySpace.SMEM),  # weight
                pl.BlockSpec(memory_space=pltpu.MemorySpace.SMEM),  # bias
                pl.BlockSpec(memory_space=pltpu.MemorySpace.VMEM),  # x slab
            ],
            out_specs=pl.BlockSpec(memory_space=pltpu.MemorySpace.VMEM),
            input_output_aliases={2: 0},
        )(w_smem, b_smem, x_slab)
    else:
        # Scaled-up path: 1-D grid over (512, 128) row blocks; mem-bound
        # elementwise at ~85% of HBM roofline, blocks small enough for every
        # generation's scoped-VMEM default.
        blk_elems = _ROWS_BLK * _LANES
        padded = pl.cdiv(n, blk_elems) * blk_elems
        rows = padded // _LANES
        x_slab = jnp.pad(x_flat, (0, padded - n)).reshape(rows, _LANES)
        y_slab = pl.pallas_call(
            _affine_kernel,
            out_shape=jax.ShapeDtypeStruct((rows, _LANES), dtype),
            grid=(rows // _ROWS_BLK,),
            in_specs=[
                pl.BlockSpec(memory_space=pltpu.MemorySpace.SMEM),   # weight
                pl.BlockSpec(memory_space=pltpu.MemorySpace.SMEM),   # bias
                pl.BlockSpec((_ROWS_BLK, _LANES), lambda i: (i, 0)),  # x block
            ],
            out_specs=pl.BlockSpec((_ROWS_BLK, _LANES), lambda i: (i, 0)),
            input_output_aliases={2: 0},
            compiler_params=pltpu.CompilerParams(
                dimension_semantics=("parallel",)
            ),
        )(w_smem, b_smem, x_slab)

    # Undo padding / restore (N, out_features) layout; fused inside the jit.
    return y_slab.reshape(-1)[:n].reshape(n, out_f)


if __name__ == "__main__":
    key = jax.random.PRNGKey(0)
    kx, kw, kb = jax.random.split(key, 3)

    # Matches the reference script: x = torch.randn(100, 1)
    x = jax.random.normal(kx, (100, 1), dtype=jnp.float32)

    # nn.Linear(1, 1) init: U(-1/sqrt(in_features), 1/sqrt(in_features)) = U(-1, 1).
    weight = jax.random.uniform(kw, (1, 1), dtype=jnp.float32, minval=-1.0, maxval=1.0)
    bias = jax.random.uniform(kb, (1,), dtype=jnp.float32, minval=-1.0, maxval=1.0)

    y = linear_forward(x, weight, bias)
    jax.block_until_ready(y)

    # Correctness vs plain-JAX nn.Linear semantics.
    y_ref = x @ weight.T + bias
    assert y.shape == (100, 1)
    assert jnp.allclose(y, y_ref, atol=1e-6, rtol=1e-6)

    # Also exercise the tiled (grid) branch once (still tiny: ~0.5 MiB f32).
    n_big = _ROWS_BLK * _LANES + 37  # forces padding and a 2-block grid
    x_big = jax.random.normal(kx, (n_big, 1), dtype=jnp.float32)
    y_big = linear_forward(x_big, weight, bias)
    jax.block_until_ready(y_big)
    assert y_big.shape == (n_big, 1)
    assert jnp.allclose(y_big, x_big @ weight.T + bias, atol=1e-6, rtol=1e-6)

    print("KERNEL_OK")
</pallas_src>

<mosaic_0001>
module attributes {stable_mosaic.version = 11 : i64} {
  func.func @_affine_kernel(%arg0: memref<1x1xf32, #tpu.memory_space<smem>>, %arg1: memref<1x1xf32, #tpu.memory_space<smem>>, %arg2: memref<8x128xf32, #tpu.memory_space<vmem>>, %arg3: memref<8x128xf32, #tpu.memory_space<vmem>>) attributes {dimension_semantics = [], scalar_prefetch = 0 : i64, scratch_operands = 0 : i64, tpu.core_type = #tpu.core_type<tc>} {
    %c0 = arith.constant 0 : index
    %c0_0 = arith.constant 0 : index
    %0 = memref.load %arg0[%c0, %c0_0] : memref<1x1xf32, #tpu.memory_space<smem>>
    %c0_1 = arith.constant 0 : index
    %c0_2 = arith.constant 0 : index
    %1 = memref.load %arg1[%c0_1, %c0_2] : memref<1x1xf32, #tpu.memory_space<smem>>
    %c0_3 = arith.constant 0 : index
    %c0_4 = arith.constant 0 : index
    %2 = vector.load %arg2[%c0_3, %c0_4] : memref<8x128xf32, #tpu.memory_space<vmem>>, vector<8x128xf32>
    %3 = vector.broadcast %0 : f32 to vector<8x128xf32>
    %4 = arith.mulf %2, %3 : vector<8x128xf32>
    %5 = vector.broadcast %1 : f32 to vector<8x128xf32>
    %6 = arith.addf %4, %5 : vector<8x128xf32>
    %c0_5 = arith.constant 0 : index
    %c0_6 = arith.constant 0 : index
    %7 = vector.load %arg3[%c0_5, %c0_6] : memref<8x128xf32, #tpu.memory_space<vmem>>, vector<8x128xf32>
    tpu.vector_store %arg3[%c0_5, %c0_6], %6 {strides = array<i32>} : memref<8x128xf32, #tpu.memory_space<vmem>>, vector<8x128xf32>,
    return
  }
}

</mosaic_0001>

<llo_original>
// kernel: linear_forward.1
$region0: #{linear_forward.1}
  #allocation0 [shape = 'u32[]', space=smem, size = 0x4, offset = 0x4, fixed_abs, tag = 'smem constant byte address 0x4 - core index']
  #allocation1 [shape = 'u32[144,128]{1,0:T(1,128)}', space=vmem, size = 0x12000, scoped, tag = 'internal scratch']
  #allocation2 [shape = 'f32[1,1]{1,0:T(1,128)S(6)}', space=smem, size = 0x200, scoped, tag = 'scoped memory for linear_forward.1']
  #allocation3 [shape = 'f32[1,1]{1,0:T(1,128)S(6)}', space=smem, size = 0x200, scoped, tag = 'scoped memory for linear_forward.1']
  %s0 = inlined_call_operand.<no memory space> [shape: f32[1,1], index: 0, kind: input, shape index: {}]
  %s1 = inlined_call_operand.<no memory space> [shape: f32[1,1], index: 1, kind: input, shape index: {}]
  %s2 = inlined_call_operand.vmem [shape: f32[8,128], index: 2, kind: input, shape index: {}, may-alias: {2,3}]
  %s3 = inlined_call_operand.vmem [shape: f32[8,128], index: 3, kind: output, shape index: {}, may-alias: {2,3}]
  %s4 = sld [smem:[#allocation0]]
  $region22: #{linear_forward.1} parent=0
    _
  %s6 = ssub.s32 1, %s4
  %s7 = scalar_select 0, %s6, %s4
  %8 = sst [smem:[#allocation2]] %s0
  %9 = sst [smem:[#allocation3]] %s1
  // Predicated region
  $region2: #{linear_forward.1} parent=0 // pred_check
    _
  $region3: #{linear_forward.1} parent=0 // pred_check_branch
    %11 = sbr.rel (0) target = $region5
  $region4: #{linear_forward.1} parent=0 // pred_region
    _
  $region5: #{linear_forward.1} parent=0 // pred_fallthru
    _
  // Predicated region
  $region6: #{linear_forward.1} parent=0 // pred_check
    _
  $region7: #{linear_forward.1} parent=0 // pred_check_branch
    %13 = sbr.rel (0) target = $region9
  $region8: #{linear_forward.1} parent=0 // pred_region
    _
  $region9: #{linear_forward.1} parent=0 // pred_fallthru
    _
  // Predicated region
  $region10: #{linear_forward.1} parent=0 // pred_check
    _
  $region11: #{linear_forward.1} parent=0 // pred_check_branch
    %15 = sbr.rel (0) target = $region13
  $region12: #{linear_forward.1} parent=0 // pred_region
    _
  $region13: #{linear_forward.1} parent=0 // pred_fallthru
    _
  %s16 = sld [smem:[#allocation2]]
  %s17 = sld [smem:[#allocation3]]
  %v18 = vld [vmem:[%s2] sm:$0xff]
  %v19 = vstv %s16
  %v20 = vmul.f32 %v18, %v19
  %v21 = vstv %s17
  %v22 = vadd.f32 %v20, %v21
  %23 = vst [vmem:[%s3] sm:$0xff] %v22
  // Predicated region
  $region14: #{linear_forward.1} parent=0 // pred_check
    _
  $region15: #{linear_forward.1} parent=0 // pred_check_branch
    %25 = sbr.rel (0) target = $region17
  $region16: #{linear_forward.1} parent=0 // pred_region
    _
  $region17: #{linear_forward.1} parent=0 // pred_fallthru
    _
  // Predicated region
  $region18: #{linear_forward.1} parent=0 // pred_check
    _
  $region19: #{linear_forward.1} parent=0 // pred_check_branch
    %27 = sbr.rel (0) target = $region21
  $region20: #{linear_forward.1} parent=0 // pred_region
    _
  $region21: #{linear_forward.1} parent=0 // pred_fallthru
    _

</llo_original>
